<compile_context>
chip_gen: v6e
topology: v6e:2x2x1
jax: 0.10.0
libtpu: 0.0.40
codegen_flags: <defaults>
</compile_context>

<pallas_src>
import functools

import jax
import jax.numpy as jnp
from jax.experimental import pallas as pl
from jax.experimental.pallas import tpu as pltpu


def _round_up(x, m):
    return (x + m - 1) // m * m


def _default_vmem_limit_bytes():
    """Generation-aware scoped-VMEM budget (~3/4 of physical, <= 100 MiB)."""
    cap = None
    try:
        cap = getattr(pltpu.get_tpu_info(), "vmem_capacity_bytes", None)
    except Exception:  # pragma: no cover - conservative fallback off-TPU
        cap = None
    if not cap:
        cap = 128 * 1024 * 1024
    return min(int(cap) * 3 // 4, 100 * 1024 * 1024)


# ---------------------------------------------------------------------------
# Path A: weights fully VMEM-resident; grid over token tiles only.
# ---------------------------------------------------------------------------
def _ffn_resident_kernel(x_ref, w1_ref, b1_ref, w2_ref, b2_ref, o_ref,
                         *scratch, tile_ff, n_chunks):
    # x_ref:  (tile_n, d_model_p)
    # w1_ref: (d_model_p, d_ff_p), b1_ref: (1, d_ff_p)
    # w2_ref: (d_ff_p, d_model_p), b2_ref: (1, d_model_p)
    # scratch: () if the output is f32 (o_ref doubles as the accumulator),
    #          else a single f32 VMEM accumulator.
    acc_ref = scratch[0] if scratch else o_ref
    acc_ref[...] = jnp.zeros_like(acc_ref)

    @pl.loop(0, n_chunks)
    def _(c):
        off = pl.multiple_of(c * tile_ff, tile_ff)
        w1c = w1_ref[:, pl.ds(off, tile_ff)]
        b1c = b1_ref[:, pl.ds(off, tile_ff)]
        w2c = w2_ref[pl.ds(off, tile_ff), :]
        # First linear chunk + bias + ReLU (operands at native dtype; f32 acc).
        h = jnp.dot(x_ref[...], w1c, preferred_element_type=jnp.float32)
        h = jnp.maximum(h + b1c.astype(jnp.float32), 0.0)
        # Dropout == identity (eval mode).
        acc_ref[...] += jnp.dot(h.astype(w2c.dtype), w2c,
                                preferred_element_type=jnp.float32)

    o_ref[...] = (acc_ref[...] +
                  b2_ref[...].astype(jnp.float32)).astype(o_ref.dtype)


def _resident_call(x2d, w1_p, b1_p, w2_p, b2_p, *, tile_n, tile_ff, n_chunks,
                   out_dtype, vmem_limit_bytes):
    n_pad, d_model_p = x2d.shape
    d_ff_p = w1_p.shape[1]
    need_scratch = jnp.dtype(out_dtype) != jnp.dtype(jnp.float32)
    scratch = ([pltpu.VMEM((tile_n, d_model_p), jnp.float32)]
               if need_scratch else [])
    kernel = functools.partial(_ffn_resident_kernel,
                               tile_ff=tile_ff, n_chunks=n_chunks)
    return pl.pallas_call(
        kernel,
        out_shape=jax.ShapeDtypeStruct((n_pad, d_model_p), out_dtype),
        grid_spec=pltpu.PrefetchScalarGridSpec(
            num_scalar_prefetch=0,
            grid=(n_pad // tile_n,),
            in_specs=[
                # token tile of x
                pl.BlockSpec((tile_n, d_model_p), lambda i: (i, 0)),
                # full weights / biases, constant index_map -> DMA'd once.
                pl.BlockSpec((d_model_p, d_ff_p), lambda i: (0, 0)),
                pl.BlockSpec((1, d_ff_p), lambda i: (0, 0)),
                pl.BlockSpec((d_ff_p, d_model_p), lambda i: (0, 0)),
                pl.BlockSpec((1, d_model_p), lambda i: (0, 0)),
            ],
            out_specs=pl.BlockSpec((tile_n, d_model_p), lambda i: (i, 0)),
            scratch_shapes=scratch,
        ),
        compiler_params=pltpu.CompilerParams(
            dimension_semantics=("parallel",),
            vmem_limit_bytes=vmem_limit_bytes,
        ),
    )(x2d, w1_p, b1_p, w2_p, b2_p)


# ---------------------------------------------------------------------------
# Path B: weights streamed in d_ff chunks; grid = (token tiles, d_ff chunks).
# ---------------------------------------------------------------------------
def _ffn_streamed_kernel(x_ref, w1_ref, b1_ref, w2_ref, b2_ref, o_ref,
                         *scratch):
    # x_ref:  (tile_n, d_model_p)
    # w1_ref: (d_model_p, tile_ff), b1_ref: (1, tile_ff)
    # w2_ref: (tile_ff, d_model_p), b2_ref: (1, d_model_p)
    acc_ref = scratch[0] if scratch else o_ref   # o_ref is resident across k
    k = pl.program_id(1)

    @pl.when(k == 0)
    def _init():
        acc_ref[...] = jnp.zeros_like(acc_ref)

    h = jnp.dot(x_ref[...], w1_ref[...], preferred_element_type=jnp.float32)
    h = jnp.maximum(h + b1_ref[...].astype(jnp.float32), 0.0)
    # Dropout == identity (eval mode).
    acc_ref[...] += jnp.dot(h.astype(w2_ref.dtype), w2_ref[...],
                            preferred_element_type=jnp.float32)

    @pl.when(k == pl.num_programs(1) - 1)
    def _finalize():
        o_ref[...] = (acc_ref[...] +
                      b2_ref[...].astype(jnp.float32)).astype(o_ref.dtype)


def _streamed_call(x2d, w1_p, b1_p, w2_p, b2_p, *, tile_n, tile_ff, out_dtype,
                   vmem_limit_bytes, weight_buffers=None):
    n_pad, d_model_p = x2d.shape
    d_ff_p = w1_p.shape[1]
    need_scratch = jnp.dtype(out_dtype) != jnp.dtype(jnp.float32)
    scratch = ([pltpu.VMEM((tile_n, d_model_p), jnp.float32)]
               if need_scratch else [])

    def _wspec(shape, imap):
        if weight_buffers is None:
            return pl.BlockSpec(shape, imap)
        # e.g. weight_buffers=3 on v5e if DMA is exposed at k-step boundaries.
        return pl.BlockSpec(shape, imap,
                            pipeline_mode=pl.Buffered(weight_buffers))

    return pl.pallas_call(
        _ffn_streamed_kernel,
        out_shape=jax.ShapeDtypeStruct((n_pad, d_model_p), out_dtype),
        grid_spec=pltpu.PrefetchScalarGridSpec(
            num_scalar_prefetch=0,
            grid=(n_pad // tile_n, d_ff_p // tile_ff),
            in_specs=[
                pl.BlockSpec((tile_n, d_model_p), lambda i, k: (i, 0)),
                _wspec((d_model_p, tile_ff), lambda i, k: (0, k)),
                pl.BlockSpec((1, tile_ff), lambda i, k: (0, k)),
                _wspec((tile_ff, d_model_p), lambda i, k: (k, 0)),
                pl.BlockSpec((1, d_model_p), lambda i, k: (0, 0)),
            ],
            out_specs=pl.BlockSpec((tile_n, d_model_p), lambda i, k: (i, 0)),
            scratch_shapes=scratch,
        ),
        compiler_params=pltpu.CompilerParams(
            dimension_semantics=("parallel", "arbitrary"),
            vmem_limit_bytes=vmem_limit_bytes,
        ),
    )(x2d, w1_p, b1_p, w2_p, b2_p)


# ---------------------------------------------------------------------------
# Public wrapper.
# ---------------------------------------------------------------------------
def positionwise_feed_forward(x, w1, b1, w2, b2, *, tile_n=1024, tile_ff=1024,
                              vmem_limit_bytes=None, compute_dtype=None,
                              weight_buffers=None,
                              force_stream_weights=False):
    """FFN forward: w2(relu(x @ w1 + b1)) + b2 (dropout == identity, eval mode).

    x: [batch, seq, d_model]; w1: [d_model, d_ff]; w2: [d_ff, d_model]
    (weights laid out [in_features, out_features], transposed vs PyTorch).

    tile_n: token tile (1024 good on v6e/v7x; 512 is enough on v5e).
    tile_ff: d_ff chunk size (multiple of 128).
    vmem_limit_bytes: scoped-VMEM budget; default is generation-aware.
    compute_dtype: optional operand dtype for x/w1/w2 (e.g. jnp.bfloat16);
      accumulation / bias / ReLU stay f32 and the output keeps x's dtype.
    weight_buffers: optional pipeline depth for streamed weight chunks (v5e).
    force_stream_weights: skip the resident-weight path (testing / huge N).
    """
    batch, seq, d_model = x.shape
    d_ff = w1.shape[1]
    n_tokens = batch * seq
    out_dtype = x.dtype

    if compute_dtype is not None:
        x = x.astype(compute_dtype)
        w1 = w1.astype(compute_dtype)
        w2 = w2.astype(compute_dtype)

    if vmem_limit_bytes is None:
        vmem_limit_bytes = _default_vmem_limit_bytes()

    # ---- layout plumbing: lane/sublane-friendly (padded) sizes --------------
    if tile_ff % 128:
        raise ValueError("tile_ff must be a multiple of 128")
    d_model_p = _round_up(d_model, 128)            # lane-dense output slab
    d_ff_p = _round_up(d_ff, 128)
    tile_ff = min(tile_ff, d_ff_p)
    d_ff_p = _round_up(d_ff_p, tile_ff)

    tile_n = min(tile_n, _round_up(n_tokens, 16))  # avoid huge pad on tiny N
    tile_n = _round_up(tile_n, 16)                 # bf16/f32 sublane safe
    n_pad = _round_up(n_tokens, tile_n)

    # Pad only when needed (aligned d_model/d_ff/n_tokens skip the extra pass).
    x2d = x.reshape(n_tokens, d_model)
    if (n_pad, d_model_p) != (n_tokens, d_model):
        x2d = jnp.pad(x2d, ((0, n_pad - n_tokens), (0, d_model_p - d_model)))
    w1_p = w1 if w1.shape == (d_model_p, d_ff_p) else jnp.pad(
        w1, ((0, d_model_p - d_model), (0, d_ff_p - d_ff)))
    w2_p = w2 if w2.shape == (d_ff_p, d_model_p) else jnp.pad(
        w2, ((0, d_ff_p - d_ff), (0, d_model_p - d_model)))
    b1_p = b1.reshape(1, d_ff)
    if d_ff_p != d_ff:
        b1_p = jnp.pad(b1_p, ((0, 0), (0, d_ff_p - d_ff)))
    b2_p = b2.reshape(1, d_model)
    if d_model_p != d_model:
        b2_p = jnp.pad(b2_p, ((0, 0), (0, d_model_p - d_model)))

    # ---- choose resident-weight vs streamed path (VMEM-fit estimate) --------
    w_sz = jnp.dtype(w1_p.dtype).itemsize
    x_sz = jnp.dtype(x2d.dtype).itemsize
    o_sz = jnp.dtype(out_dtype).itemsize
    need_scratch = jnp.dtype(out_dtype) != jnp.dtype(jnp.float32)
    resident_bytes = (
        2 * 2 * d_model_p * d_ff_p * w_sz        # w1 + w2 (assume 2 buffers)
        + 2 * tile_n * d_model_p * x_sz          # x tile, double-buffered
        + 2 * tile_n * d_model_p * o_sz          # out tile, double-buffered
        + (tile_n * d_model_p * 4 if need_scratch else 0)   # f32 accumulator
        + 2 * tile_n * tile_ff * 4               # f32 h-chunk intermediate
    )
    headroom = 4 * 1024 * 1024
    use_resident = (not force_stream_weights and
                    resident_bytes + headroom <= vmem_limit_bytes)

    if use_resident:
        out2d = _resident_call(
            x2d, w1_p, b1_p, w2_p, b2_p, tile_n=tile_n, tile_ff=tile_ff,
            n_chunks=d_ff_p // tile_ff, out_dtype=out_dtype,
            vmem_limit_bytes=vmem_limit_bytes)
    else:
        out2d = _streamed_call(
            x2d, w1_p, b1_p, w2_p, b2_p, tile_n=tile_n, tile_ff=tile_ff,
            out_dtype=out_dtype, vmem_limit_bytes=vmem_limit_bytes,
            weight_buffers=weight_buffers)

    if (n_pad, d_model_p) != (n_tokens, d_model):
        out2d = out2d[:n_tokens, :d_model]
    return out2d.reshape(batch, seq, d_model)


def _reference(x, w1, b1, w2, b2):
    h = jnp.maximum(jnp.einsum("bsd,df->bsf", x, w1) + b1, 0.0)
    return jnp.einsum("bsf,fd->bsd", h, w2) + b2


if __name__ == "__main__":
    key = jax.random.PRNGKey(0)
    kx, k1, k2, k3, k4 = jax.random.split(key, 5)

    # ---- Test 1: small unaligned shapes, auto (resident-weight) path --------
    batch, seq, d_model, d_ff = 2, 8, 32, 64
    x = jax.random.normal(kx, (batch, seq, d_model), dtype=jnp.float32)
    w1 = jax.random.normal(k1, (d_model, d_ff), dtype=jnp.float32) * 0.1
    b1 = jax.random.normal(k2, (d_ff,), dtype=jnp.float32) * 0.1
    w2 = jax.random.normal(k3, (d_ff, d_model), dtype=jnp.float32) * 0.1
    b2 = jax.random.normal(k4, (d_model,), dtype=jnp.float32) * 0.1

    y = jax.block_until_ready(positionwise_feed_forward(x, w1, b1, w2, b2))
    y_ref = _reference(x, w1, b1, w2, b2)
    assert y.shape == (batch, seq, d_model)
    assert jnp.allclose(y, y_ref, atol=1e-4, rtol=1e-4), "test1 mismatch"

    # ---- Test 2: aligned shapes; multi-chunk resident loop + streamed path --
    kx2, k5, k6, k7, k8 = jax.random.split(jax.random.PRNGKey(1), 5)
    b2_, s2_, dm2, dff2 = 2, 4, 128, 256
    x2 = jax.random.normal(kx2, (b2_, s2_, dm2), dtype=jnp.float32)
    w1b = jax.random.normal(k5, (dm2, dff2), dtype=jnp.float32) * 0.05
    b1b = jax.random.normal(k6, (dff2,), dtype=jnp.float32) * 0.05
    w2b = jax.random.normal(k7, (dff2, dm2), dtype=jnp.float32) * 0.05
    b2b = jax.random.normal(k8, (dm2,), dtype=jnp.float32) * 0.05
    y2_ref = _reference(x2, w1b, b1b, w2b, b2b)

    y2a = jax.block_until_ready(
        positionwise_feed_forward(x2, w1b, b1b, w2b, b2b, tile_ff=128))
    assert jnp.allclose(y2a, y2_ref, atol=1e-4, rtol=1e-4), "test2a mismatch"

    y2b = jax.block_until_ready(
        positionwise_feed_forward(x2, w1b, b1b, w2b, b2b, tile_ff=128,
                                  force_stream_weights=True))
    assert jnp.allclose(y2b, y2_ref, atol=1e-4, rtol=1e-4), "test2b mismatch"

    # ---- Test 3: bf16 operands (f32 accumulate), scratch-accumulator branch -
    xb, w1c, w2c = (x2.astype(jnp.bfloat16), w1b.astype(jnp.bfloat16),
                    w2b.astype(jnp.bfloat16))
    y3_ref = _reference(xb.astype(jnp.float32), w1c.astype(jnp.float32), b1b,
                        w2c.astype(jnp.float32), b2b)
    y3a = jax.block_until_ready(
        positionwise_feed_forward(xb, w1c, b1b, w2c, b2b, tile_ff=128))
    y3b = jax.block_until_ready(
        positionwise_feed_forward(xb, w1c, b1b, w2c, b2b, tile_ff=128,
                                  force_stream_weights=True))
    assert y3a.dtype == jnp.bfloat16 and y3b.dtype == jnp.bfloat16
    assert jnp.allclose(y3a.astype(jnp.float32), y3_ref, atol=3e-2, rtol=3e-2)
    assert jnp.allclose(y3b.astype(jnp.float32), y3_ref, atol=3e-2, rtol=3e-2)

    print("KERNEL_OK")
</pallas_src>

<mosaic_0001>
module attributes {stable_mosaic.version = 11 : i64} {
  func.func @_ffn_resident_kernel(%arg0: i32, %arg1: memref<16x128xf32, #tpu.memory_space<vmem>>, %arg2: memref<128x128xf32, #tpu.memory_space<vmem>>, %arg3: memref<1x128xf32, #tpu.memory_space<vmem>>, %arg4: memref<128x128xf32, #tpu.memory_space<vmem>>, %arg5: memref<1x128xf32, #tpu.memory_space<vmem>>, %arg6: memref<16x128xf32, #tpu.memory_space<vmem>>) attributes {dimension_semantics = [#tpu.dimension_semantics<parallel>], iteration_bounds = array<i64: 1>, scalar_prefetch = 0 : i64, scratch_operands = 0 : i64, tpu.core_type = #tpu.core_type<tc>, window_params = [{transform_indices = @transform_0, window_bounds = array<i64: 16, 128>}, {pipeline_mode = #tpu.pipeline_mode<synchronous>, transform_indices = @transform_1, window_bounds = array<i64: 128, 128>}, {pipeline_mode = #tpu.pipeline_mode<synchronous>, transform_indices = @transform_2, window_bounds = array<i64: 1, 128>}, {pipeline_mode = #tpu.pipeline_mode<synchronous>, transform_indices = @transform_3, window_bounds = array<i64: 128, 128>}, {pipeline_mode = #tpu.pipeline_mode<synchronous>, transform_indices = @transform_4, window_bounds = array<i64: 1, 128>}, {transform_indices = @transform_5, window_bounds = array<i64: 16, 128>}]} {
    %cst = arith.constant 0.000000e+00 : f32
    %0 = vector.broadcast %cst : f32 to vector<16x128xf32>
    %c0 = arith.constant 0 : index
    %c0_0 = arith.constant 0 : index
    %1 = vector.load %arg6[%c0, %c0_0] : memref<16x128xf32, #tpu.memory_space<vmem>>, vector<16x128xf32>
    tpu.vector_store %arg6[%c0, %c0_0], %0 {strides = array<i32>} : memref<16x128xf32, #tpu.memory_space<vmem>>, vector<16x128xf32>,
    %c0_i32 = arith.constant 0 : i32
    %c1_i32 = arith.constant 1 : i32
    %2 = arith.muli %c0_i32, %c1_i32 : i32
    %c0_i32_1 = arith.constant 0 : i32
    %3 = arith.addi %c0_i32_1, %2 : i32
    %c128_i32 = arith.constant 128 : i32
    %4 = arith.muli %3, %c128_i32 : i32
    %5 = tpu.assume_multiple %4, 128 : i32
    %c0_2 = arith.constant 0 : index
    %6 = arith.index_cast %5 : i32 to index
    %7 = vector.load %arg2[%c0_2, %6] : memref<128x128xf32, #tpu.memory_space<vmem>>, vector<128x128xf32>
    %c0_3 = arith.constant 0 : index
    %8 = arith.index_cast %5 : i32 to index
    %9 = vector.load %arg3[%c0_3, %8] : memref<1x128xf32, #tpu.memory_space<vmem>>, vector<1x128xf32>
    %10 = arith.index_cast %5 : i32 to index
    %c0_4 = arith.constant 0 : index
    %11 = vector.load %arg4[%10, %c0_4] : memref<128x128xf32, #tpu.memory_space<vmem>>, vector<128x128xf32>
    %c0_5 = arith.constant 0 : index
    %c0_6 = arith.constant 0 : index
    %12 = vector.load %arg1[%c0_5, %c0_6] : memref<16x128xf32, #tpu.memory_space<vmem>>, vector<16x128xf32>
    %cst_7 = arith.constant dense<0.000000e+00> : vector<16x128xf32>
    %13 = tpu.matmul %12, %7, %cst_7 {dimension_numbers = #tpu.dot_dimension_numbers<[1], [0], [0], [1], [0, 0, 1, 1], [], []>} : vector<16x128xf32>, vector<128x128xf32>, vector<16x128xf32> -> vector<16x128xf32>
    %14 = vector.broadcast %9 : vector<1x128xf32> to vector<16x128xf32>
    %15 = arith.addf %13, %14 : vector<16x128xf32>
    %cst_8 = arith.constant 0.000000e+00 : f32
    %16 = vector.broadcast %cst_8 : f32 to vector<16x128xf32>
    %17 = arith.maximumf %15, %16 : vector<16x128xf32>
    %c0_9 = arith.constant 0 : index
    %c0_10 = arith.constant 0 : index
    %18 = vector.load %arg6[%c0_9, %c0_10] : memref<16x128xf32, #tpu.memory_space<vmem>>, vector<16x128xf32>
    %cst_11 = arith.constant dense<0.000000e+00> : vector<16x128xf32>
    %19 = tpu.matmul %17, %11, %cst_11 {dimension_numbers = #tpu.dot_dimension_numbers<[1], [0], [0], [1], [0, 0, 1, 1], [], []>} : vector<16x128xf32>, vector<128x128xf32>, vector<16x128xf32> -> vector<16x128xf32>
    %20 = arith.addf %18, %19 : vector<16x128xf32>
    %c0_12 = arith.constant 0 : index
    %c0_13 = arith.constant 0 : index
    %21 = vector.load %arg6[%c0_12, %c0_13] : memref<16x128xf32, #tpu.memory_space<vmem>>, vector<16x128xf32>
    tpu.vector_store %arg6[%c0_12, %c0_13], %20 {strides = array<i32>} : memref<16x128xf32, #tpu.memory_space<vmem>>, vector<16x128xf32>,
    %c1_i32_14 = arith.constant 1 : i32
    %c0_15 = arith.constant 0 : index
    %c0_16 = arith.constant 0 : index
    %22 = vector.load %arg6[%c0_15, %c0_16] : memref<16x128xf32, #tpu.memory_space<vmem>>, vector<16x128xf32>
    %c0_17 = arith.constant 0 : index
    %c0_18 = arith.constant 0 : index
    %23 = vector.load %arg5[%c0_17, %c0_18] : memref<1x128xf32, #tpu.memory_space<vmem>>, vector<1x128xf32>
    %24 = vector.broadcast %23 : vector<1x128xf32> to vector<16x128xf32>
    %25 = arith.addf %22, %24 : vector<16x128xf32>
    %c0_19 = arith.constant 0 : index
    %c0_20 = arith.constant 0 : index
    %26 = vector.load %arg6[%c0_19, %c0_20] : memref<16x128xf32, #tpu.memory_space<vmem>>, vector<16x128xf32>
    tpu.vector_store %arg6[%c0_19, %c0_20], %25 {strides = array<i32>} : memref<16x128xf32, #tpu.memory_space<vmem>>, vector<16x128xf32>,
    return
  }
  func.func @transform_0(%arg0: i32) -> (i32, i32) {
    %c0_i32 = arith.constant 0 : i32
    %c0_i32_0 = arith.constant 0 : i32
    return %arg0, %c0_i32 : i32, i32
  }
  func.func @transform_1(%arg0: i32) -> (i32, i32) {
    %c0_i32 = arith.constant 0 : i32
    %c0_i32_0 = arith.constant 0 : i32
    %c0_i32_1 = arith.constant 0 : i32
    return %c0_i32, %c0_i32_0 : i32, i32
  }
  func.func @transform_2(%arg0: i32) -> (i32, i32) {
    %c0_i32 = arith.constant 0 : i32
    %c0_i32_0 = arith.constant 0 : i32
    %c0_i32_1 = arith.constant 0 : i32
    return %c0_i32, %c0_i32_0 : i32, i32
  }
  func.func @transform_3(%arg0: i32) -> (i32, i32) {
    %c0_i32 = arith.constant 0 : i32
    %c0_i32_0 = arith.constant 0 : i32
    %c0_i32_1 = arith.constant 0 : i32
    return %c0_i32, %c0_i32_0 : i32, i32
  }
  func.func @transform_4(%arg0: i32) -> (i32, i32) {
    %c0_i32 = arith.constant 0 : i32
    %c0_i32_0 = arith.constant 0 : i32
    %c0_i32_1 = arith.constant 0 : i32
    return %c0_i32, %c0_i32_0 : i32, i32
  }
  func.func @transform_5(%arg0: i32) -> (i32, i32) {
    %c0_i32 = arith.constant 0 : i32
    %c0_i32_0 = arith.constant 0 : i32
    return %arg0, %c0_i32 : i32, i32
  }
}

</mosaic_0001>

<llo_original>
// kernel: tpu_custom_call.1
$region0: #{tpu_custom_call.1}
  #allocation0 [shape = 'u32[]', space=smem, size = 0x4, offset = 0x4, fixed_abs, tag = 'smem constant byte address 0x4 - core index']
  #allocation1 [shape = 'u32[144,128]{1,0:T(1,128)}', space=vmem, size = 0x12000, scoped, tag = 'internal scratch']
  %s0 = inlined_call_operand.hbm [shape: f32[16,128], index: 0, kind: input, shape index: {}]
  %s1 = inlined_call_operand.hbm [shape: f32[128,128], index: 1, kind: input, shape index: {}]
  %s2 = inlined_call_operand.vmem [shape: f32[1,128], index: 2, kind: input, shape index: {}]
  %s3 = inlined_call_operand.hbm [shape: f32[128,128], index: 3, kind: input, shape index: {}]
  %s4 = inlined_call_operand.vmem [shape: f32[1,128], index: 4, kind: input, shape index: {}]
  %s5 = inlined_call_operand.hbm [shape: f32[16,128], index: 5, kind: output, shape index: {}]
  %s6 = sld [smem:[#allocation0]]
  $region42: #{tpu_custom_call.1} parent=0
    _
  %s8 = ssub.s32 1, %s6
  %s9 = scalar_select 0, %s8, %s6
  $region1: #{tpu_custom_call.1} parent=0
    #allocation2 [shape = 'u8[8192]{0}', space=vmem, size = 0x2000, scoped, tag = 'input window, operand 0, single buffered']
    #allocation3 [shape = 's32[1]{0}', space=sflag, size = 0x4, scoped, tag = 'scoped memory for tpu_custom_call.1']
    #allocation4 [shape = 's32[1]{0}', space=sflag, size = 0x4, scoped, tag = 'scoped memory for tpu_custom_call.1']
    #allocation5 [shape = 'u8[65536]{0}', space=vmem, size = 0x10000, scoped, tag = 'input window, operand 1, single buffered']
    #allocation6 [shape = 's32[1]{0}', space=sflag, size = 0x4, scoped, tag = 'scoped memory for tpu_custom_call.1']
    #allocation7 [shape = 'u8[65536]{0}', space=vmem, size = 0x10000, scoped, tag = 'input window, operand 3, single buffered']
    #allocation8 [shape = 'u8[8192]{0}', space=vmem, size = 0x2000, scoped, tag = 'output window, operand 0, single buffered']
    %10 = vsyncpa [#allocation3], 0
    %11 = vsyncpa [#allocation6], 0
    %12 = vsyncpa [#allocation4], 0
    // Predicated region
    $region2: #{tpu_custom_call.1} parent=1 // pred_check
      _
    $region3: #{tpu_custom_call.1} parent=1 // pred_check_branch
      %14 = sbr.rel (0) target = $region5
    $region4: #{tpu_custom_call.1} parent=1 // pred_region
      %s16 = ssub.s32 256, 256
      %17 = vsyncadd [#allocation3], %s16
      %s18 = sshll.u32 [#allocation2], 4
      %s19 = int_to_ptr.vmem [resolvable:$true] %s18
      %24 = dma.hbm_to_vmem [thread:$0]  %s0, 256, %s19, [#allocation3], 128, 128, 8
    $region5: #{tpu_custom_call.1} parent=1 // pred_fallthru
      _
    // Predicated region
    $region6: #{tpu_custom_call.1} parent=1 // pred_check
      _
    $region7: #{tpu_custom_call.1} parent=1 // pred_check_branch
      %26 = sbr.rel (0) target = $region9
    $region8: #{tpu_custom_call.1} parent=1 // pred_region
      %s28 = ssub.s32 2048, 2048
      %29 = vsyncadd [#allocation6], %s28
      %s30 = sshll.u32 [#allocation5], 4
      %s31 = int_to_ptr.vmem [resolvable:$true] %s30
      %36 = dma.hbm_to_vmem [thread:$0]  %s1, 2048, %s31, [#allocation6], 128, 128, 8
    $region9: #{tpu_custom_call.1} parent=1 // pred_fallthru
      _
    // Predicated region
    $region10: #{tpu_custom_call.1} parent=1 // pred_check
      _
    $region11: #{tpu_custom_call.1} parent=1 // pred_check_branch
      %38 = sbr.rel (0) target = $region13
    $region12: #{tpu_custom_call.1} parent=1 // pred_region
      _
    $region13: #{tpu_custom_call.1} parent=1 // pred_fallthru
      _
    // Predicated region
    $region14: #{tpu_custom_call.1} parent=1 // pred_check
      _
    $region15: #{tpu_custom_call.1} parent=1 // pred_check_branch
      %40 = sbr.rel (0) target = $region17
    $region16: #{tpu_custom_call.1} parent=1 // pred_region
      %s42 = ssub.s32 2048, 2048
      %43 = vsyncadd [#allocation6], %s42
      %s44 = sshll.u32 [#allocation7], 4
      %s45 = int_to_ptr.vmem [resolvable:$true] %s44
      %50 = dma.hbm_to_vmem [thread:$0]  %s3, 2048, %s45, [#allocation6], 128, 128, 8
    $region17: #{tpu_custom_call.1} parent=1 // pred_fallthru
      _
    // Predicated region
    $region18: #{tpu_custom_call.1} parent=1 // pred_check
      _
    $region19: #{tpu_custom_call.1} parent=1 // pred_check_branch
      %52 = sbr.rel (0) target = $region21
    $region20: #{tpu_custom_call.1} parent=1 // pred_region
      _
    $region21: #{tpu_custom_call.1} parent=1 // pred_fallthru
      _
    // Predicated region
    $region22: #{tpu_custom_call.1} parent=1 // pred_check
      _
    $region23: #{tpu_custom_call.1} parent=1 // pred_check_branch
      %54 = sbr.rel (0) target = $region25
    $region24: #{tpu_custom_call.1} parent=1 // pred_region
      %55 = dma.done [#allocation3], 256
    $region25: #{tpu_custom_call.1} parent=1 // pred_fallthru
      _
    // Predicated region
    $region26: #{tpu_custom_call.1} parent=1 // pred_check
      _
    $region27: #{tpu_custom_call.1} parent=1 // pred_check_branch
      %57 = sbr.rel (0) target = $region29
    $region28: #{tpu_custom_call.1} parent=1 // pred_region
      %58 = dma.done [#allocation6], 2048
    $region29: #{tpu_custom_call.1} parent=1 // pred_fallthru
      _
    // Predicated region
    $region30: #{tpu_custom_call.1} parent=1 // pred_check
      _
    $region31: #{tpu_custom_call.1} parent=1 // pred_check_branch
      %60 = sbr.rel (0) target = $region33
    $region32: #{tpu_custom_call.1} parent=1 // pred_region
      %61 = dma.done [#allocation6], 2048
    $region33: #{tpu_custom_call.1} parent=1 // pred_fallthru
      _
    %62 = vst [vmem:[#allocation8] sm:$0xff] 0.0
    %63 = vst [vmem:[#allocation8 + $0x8] sm:$0xff] 0.0
    %v64 = vld [vmem:[#allocation5] sm:$0xff]
    %v65 = vld [vmem:[#allocation5 + $0x8] sm:$0xff]
    %v66 = vld [vmem:[#allocation5 + $0x10] sm:$0xff]
    %v67 = vld [vmem:[#allocation5 + $0x18] sm:$0xff]
    %v68 = vld [vmem:[#allocation5 + $0x20] sm:$0xff]
    %v69 = vld [vmem:[#allocation5 + $0x28] sm:$0xff]
    %v70 = vld [vmem:[#allocation5 + $0x30] sm:$0xff]
    %v71 = vld [vmem:[#allocation5 + $0x38] sm:$0xff]
    %v72 = vld [vmem:[#allocation5 + $0x40] sm:$0xff]
    %v73 = vld [vmem:[#allocation5 + $0x48] sm:$0xff]
    %v74 = vld [vmem:[#allocation5 + $0x50] sm:$0xff]
    %v75 = vld [vmem:[#allocation5 + $0x58] sm:$0xff]
    %v76 = vld [vmem:[#allocation5 + $0x60] sm:$0xff]
    %v77 = vld [vmem:[#allocation5 + $0x68] sm:$0xff]
    %v78 = vld [vmem:[#allocation5 + $0x70] sm:$0xff]
    %v79 = vld [vmem:[#allocation5 + $0x78] sm:$0xff]
    %v80 = vld [vmem:[%s2] sm:$0x1]
    %v81 = vld [vmem:[#allocation7] sm:$0xff]
    %v82 = vld [vmem:[#allocation7 + $0x8] sm:$0xff]
    %v83 = vld [vmem:[#allocation7 + $0x10] sm:$0xff]
    %v84 = vld [vmem:[#allocation7 + $0x18] sm:$0xff]
    %v85 = vld [vmem:[#allocation7 + $0x20] sm:$0xff]
    %v86 = vld [vmem:[#allocation7 + $0x28] sm:$0xff]
    %v87 = vld [vmem:[#allocation7 + $0x30] sm:$0xff]
    %v88 = vld [vmem:[#allocation7 + $0x38] sm:$0xff]
    %v89 = vld [vmem:[#allocation7 + $0x40] sm:$0xff]
    %v90 = vld [vmem:[#allocation7 + $0x48] sm:$0xff]
    %v91 = vld [vmem:[#allocation7 + $0x50] sm:$0xff]
    %v92 = vld [vmem:[#allocation7 + $0x58] sm:$0xff]
    %v93 = vld [vmem:[#allocation7 + $0x60] sm:$0xff]
    %v94 = vld [vmem:[#allocation7 + $0x68] sm:$0xff]
    %v95 = vld [vmem:[#allocation7 + $0x70] sm:$0xff]
    %v96 = vld [vmem:[#allocation7 + $0x78] sm:$0xff]
    %v97 = vld [vmem:[#allocation2] sm:$0xff]
    %v98 = vld [vmem:[#allocation2 + $0x8] sm:$0xff]
    %v100 = vlaneseq
    %v101 = vshrl.u32 %v100, 7
    %v102 = vsub.s32 0, %v101
    %v103 = vrot.slane %v80, %v102
    %105 = vmatprep.subr.mxu0 0.0
    %106 = vmatpush1.msra.mxu0 %v79
    %107 = vmatprep.subr.mxu0 0.0
    %108 = vmatpush1.msra.mxu0 %v78
    %109 = vmatprep.subr.mxu0 0.0
    %110 = vmatpush1.msra.mxu0 %v77
    %111 = vmatprep.subr.mxu0 0.0
    %112 = vmatpush1.msra.mxu0 %v76
    %113 = vmatprep.subr.mxu0 0.0
    %114 = vmatpush1.msra.mxu0 %v75
    %115 = vmatprep.subr.mxu0 0.0
    %116 = vmatpush1.msra.mxu0 %v74
    %117 = vmatprep.subr.mxu0 0.0
    %118 = vmatpush1.msra.mxu0 %v73
    %119 = vmatprep.subr.mxu0 0.0
    %120 = vmatpush1.msra.mxu0 %v72
    %121 = vmatprep.subr.mxu0 0.0
    %122 = vmatpush1.msra.mxu0 %v71
    %123 = vmatprep.subr.mxu0 0.0
    %124 = vmatpush1.msra.mxu0 %v70
    %125 = vmatprep.subr.mxu0 0.0
    %126 = vmatpush1.msra.mxu0 %v69
    %127 = vmatprep.subr.mxu0 0.0
    %128 = vmatpush1.msra.mxu0 %v68
    %129 = vmatprep.subr.mxu0 0.0
    %130 = vmatpush1.msra.mxu0 %v67
    %131 = vmatprep.subr.mxu0 0.0
    %132 = vmatpush1.msra.mxu0 %v66
    %133 = vmatprep.subr.mxu0 0.0
    %134 = vmatpush1.msra.mxu0 %v65
    %135 = vmatprep.subr.mxu0 0.0
    %136 = vmatpush1.msra.mxu0 %v64
    %137 = vmatprep.subr.mxu0 0.0
    %138 = vmatpush2.msra.mxu0 0.0
    %139 = vmatprep.subr.mxu0 0.0
    %140 = vmatpush2.msra.mxu0 0.0
    %141 = vmatprep.subr.mxu0 0.0
    %142 = vmatpush2.msra.mxu0 0.0
    %143 = vmatprep.subr.mxu0 0.0
    %144 = vmatpush2.msra.mxu0 0.0
    %145 = vmatprep.subr.mxu0 0.0
    %146 = vmatpush2.msra.mxu0 0.0
    %147 = vmatprep.subr.mxu0 0.0
    %148 = vmatpush2.msra.mxu0 0.0
    %149 = vmatprep.subr.mxu0 0.0
    %150 = vmatpush2.msra.mxu0 0.0
    %151 = vmatprep.subr.mxu0 0.0
    %152 = vmatpush2.msra.mxu0 0.0
    %153 = vmatprep.subr.mxu0 0.0
    %154 = vmatpush2.msra.mxu0 0.0
    %155 = vmatprep.subr.mxu0 0.0
    %156 = vmatpush2.msra.mxu0 0.0
    %157 = vmatprep.subr.mxu0 0.0
    %158 = vmatpush2.msra.mxu0 0.0
    %159 = vmatprep.subr.mxu0 0.0
    %160 = vmatpush2.msra.mxu0 0.0
    %161 = vmatprep.subr.mxu0 0.0
    %162 = vmatpush2.msra.mxu0 0.0
    %163 = vmatprep.subr.mxu0 0.0
    %164 = vmatpush2.msra.mxu0 0.0
    %165 = vmatprep.subr.mxu0 0.0
    %166 = vmatpush2.msra.mxu0 0.0
    %167 = vmatprep.subr.mxu0 0.0
    %168 = vmatpush2.msra.mxu0 0.0
    %169 = vmatprep.mubr.f32.mxu0 0.0
    %170 = vmatmul.mubr.f32.gmra.mxu0 %v97
    %v171 = vpop.f32.mrf.mxu0
    %v172 = vadd.f32 %v103, %v171
    %v173 = vpop.f32.mrf.mxu0
    %174 = vmatprep.mubr.f32.mxu0 0.0
    %175 = vmatmul.mubr.f32.gmra.mxu0 %v98
    %v176 = vpop.f32.mrf.mxu0
    %v177 = vadd.f32 %v103, %v176
    %v178 = vpop.f32.mrf.mxu0
    %179 = vdwg.mxu0
    %v180 = vmax.f32 %v172, 0.0
    %v181 = vmax.f32 %v177, 0.0
    %v182 = vld [vmem:[#allocation8] sm:$0xff]
    %v183 = vld [vmem:[#allocation8 + $0x8] sm:$0xff]
    %184 = vmatprep.subr.mxu0 0.0
    %185 = vmatpush1.msra.mxu0 %v96
    %186 = vmatprep.subr.mxu0 0.0
    %187 = vmatpush1.msra.mxu0 %v95
    %188 = vmatprep.subr.mxu0 0.0
    %189 = vmatpush1.msra.mxu0 %v94
    %190 = vmatprep.subr.mxu0 0.0
    %191 = vmatpush1.msra.mxu0 %v93
    %192 = vmatprep.subr.mxu0 0.0
    %193 = vmatpush1.msra.mxu0 %v92
    %194 = vmatprep.subr.mxu0 0.0
    %195 = vmatpush1.msra.mxu0 %v91
    %196 = vmatprep.subr.mxu0 0.0
    %197 = vmatpush1.msra.mxu0 %v90
    %198 = vmatprep.subr.mxu0 0.0
    %199 = vmatpush1.msra.mxu0 %v89
    %200 = vmatprep.subr.mxu0 0.0
    %201 = vmatpush1.msra.mxu0 %v88
    %202 = vmatprep.subr.mxu0 0.0
    %203 = vmatpush1.msra.mxu0 %v87
    %204 = vmatprep.subr.mxu0 0.0
    %205 = vmatpush1.msra.mxu0 %v86
    %206 = vmatprep.subr.mxu0 0.0
    %207 = vmatpush1.msra.mxu0 %v85
    %208 = vmatprep.subr.mxu0 0.0
    %209 = vmatpush1.msra.mxu0 %v84
    %210 = vmatprep.subr.mxu0 0.0
    %211 = vmatpush1.msra.mxu0 %v83
    %212 = vmatprep.subr.mxu0 0.0
    %213 = vmatpush1.msra.mxu0 %v82
    %214 = vmatprep.subr.mxu0 0.0
    %215 = vmatpush1.msra.mxu0 %v81
    %216 = vmatprep.subr.mxu0 0.0
    %217 = vmatpush2.msra.mxu0 0.0
    %218 = vmatprep.subr.mxu0 0.0
    %219 = vmatpush2.msra.mxu0 0.0
    %220 = vmatprep.subr.mxu0 0.0
    %221 = vmatpush2.msra.mxu0 0.0
    %222 = vmatprep.subr.mxu0 0.0
    %223 = vmatpush2.msra.mxu0 0.0
    %224 = vmatprep.subr.mxu0 0.0
    %225 = vmatpush2.msra.mxu0 0.0
    %226 = vmatprep.subr.mxu0 0.0
    %227 = vmatpush2.msra.mxu0 0.0
    %228 = vmatprep.subr.mxu0 0.0
    %229 = vmatpush2.msra.mxu0 0.0
    %230 = vmatprep.subr.mxu0 0.0
    %231 = vmatpush2.msra.mxu0 0.0
    %232 = vmatprep.subr.mxu0 0.0
    %233 = vmatpush2.msra.mxu0 0.0
    %234 = vmatprep.subr.mxu0 0.0
    %235 = vmatpush2.msra.mxu0 0.0
    %236 = vmatprep.subr.mxu0 0.0
    %237 = vmatpush2.msra.mxu0 0.0
    %238 = vmatprep.subr.mxu0 0.0
    %239 = vmatpush2.msra.mxu0 0.0
    %240 = vmatprep.subr.mxu0 0.0
    %241 = vmatpush2.msra.mxu0 0.0
    %242 = vmatprep.subr.mxu0 0.0
    %243 = vmatpush2.msra.mxu0 0.0
    %244 = vmatprep.subr.mxu0 0.0
    %245 = vmatpush2.msra.mxu0 0.0
    %246 = vmatprep.subr.mxu0 0.0
    %247 = vmatpush2.msra.mxu0 0.0
    %248 = vmatprep.mubr.f32.mxu0 0.0
    %249 = vmatmul.mubr.f32.gmra.mxu0 %v180
    %v250 = vpop.f32.mrf.mxu0
    %v251 = vadd.f32 0.0, %v250
    %v252 = vpop.f32.mrf.mxu0
    %253 = vmatprep.mubr.f32.mxu0 0.0
    %254 = vmatmul.mubr.f32.gmra.mxu0 %v181
    %v255 = vpop.f32.mrf.mxu0
    %v256 = vadd.f32 0.0, %v255
    %v257 = vpop.f32.mrf.mxu0
    %258 = vdwg.mxu0
    %v259 = vadd.f32 %v182, %v251
    %v260 = vadd.f32 %v183, %v256
    %261 = vst [vmem:[#allocation8] sm:$0xff] %v259
    %262 = vst [vmem:[#allocation8 + $0x8] sm:$0xff] %v260
    %v263 = vld [vmem:[#allocation8] sm:$0xff]
    %v264 = vld [vmem:[#allocation8 + $0x8] sm:$0xff]
    %v265 = vld [vmem:[%s4] sm:$0x1]
    %v267 = vlaneseq
    %v268 = vshrl.u32 %v267, 7
    %v269 = vsub.s32 0, %v268
    %v270 = vrot.slane %v265, %v269
    %v272 = vadd.f32 %v263, %v270
    %v273 = vadd.f32 %v264, %v270
    %274 = vst [vmem:[#allocation8] sm:$0xff] %v272
    %275 = vst [vmem:[#allocation8 + $0x8] sm:$0xff] %v273
    // Predicated region
    $region34: #{tpu_custom_call.1} parent=1 // pred_check
      _
    $region35: #{tpu_custom_call.1} parent=1 // pred_check_branch
      %277 = sbr.rel (0) target = $region37
    $region36: #{tpu_custom_call.1} parent=1 // pred_region
      %s279 = ssub.s32 256, 256
      %280 = vsyncadd [#allocation4], %s279
      %s281 = sshll.u32 [#allocation8], 4
      %s282 = int_to_ptr.vmem [resolvable:$true] %s281
      %287 = dma.vmem_to_hbm [thread:$0]  %s282, 256, %s5, [#allocation4], 128, 128, 8
    $region37: #{tpu_custom_call.1} parent=1 // pred_fallthru
      _
    // Predicated region
    $region38: #{tpu_custom_call.1} parent=1 // pred_check
      _
    $region39: #{tpu_custom_call.1} parent=1 // pred_check_branch
      %289 = sbr.rel (0) target = $region41
    $region40: #{tpu_custom_call.1} parent=1 // pred_region
      %290 = dma.done [#allocation4], 256
    $region41: #{tpu_custom_call.1} parent=1 // pred_fallthru
      _
    %291 = vsyncpa [#allocation3], 1
    %292 = vsyncpa [#allocation6], 1
    %293 = vsyncpa [#allocation4], 1

</llo_original>
